<compile_context>
chip_gen: v7x
topology: tpu7x:2x2x1
jax: 0.10.0
libtpu: 0.0.40
codegen_flags: <defaults>
</compile_context>

<pallas_src>
import math
import functools

import jax
import jax.numpy as jnp
from jax import lax
from jax.experimental import pallas as pl
from jax.experimental.pallas import tpu as pltpu


def _round_up(x: int, m: int) -> int:
    return ((x + m - 1) // m) * m


def _pick_tile(dim: int, target: int, granule: int) -> int:
    """Largest multiple of `granule` that is <= min(target, aligned) and divides
    aligned = round_up(dim, granule).  This keeps padding <= granule-1 elements
    (zero for already-aligned dims) so we never copy the whole operand in HBM."""
    aligned = _round_up(max(dim, 1), granule)
    cap = max(granule, min(target, aligned))
    units = aligned // granule
    max_units = max(1, cap // granule)
    best = 1
    d = 1
    while d * d <= units:
        if units % d == 0:
            q = units // d
            if d <= max_units and d > best:
                best = d
            if q <= max_units and q > best:
                best = q
        d += 1
    return best * granule


def _vmem_need_bytes(tm: int, tn: int, tk: int) -> int:
    bf16 = 2
    return (2 * (tm * tk + tn * tk + tn) * bf16   # double-buffered bf16 inputs
            + 2 * tm * tn * bf16                  # double-buffered bf16 output
            + tm * tn * 4)                        # f32 accumulator scratch


def _generation_defaults():
    """Per-generation tile targets, VMEM budget, and multicore flag."""
    kind = ""
    try:
        kind = jax.devices()[0].device_kind.lower()
    except Exception:
        pass
    vmem_cap = None
    try:
        vmem_cap = pltpu.get_tpu_info().vmem_capacity_bytes
    except Exception:
        vmem_cap = None

    is_v7 = "v7" in kind or (vmem_cap is not None and vmem_cap <= (64 << 20))
    is_v5e = ("v5" in kind and "v5p" not in kind) or "v5e" in kind or "v5 lite" in kind

    if is_v7:
        # 64 MiB VMEM / TC, 2 TCs, ~3.2 TB/s HBM: big N/K tiles for small-M path.
        tm_t, tn_t, tk_t = 256, 1024, 2048
        budget = min((vmem_cap or (64 << 20)) * 3 // 4, 48 << 20)
        multicore = True
    elif is_v5e:
        # 197 TF/s, 0.82 TB/s, 1 vst slot: big M/N, moderate K.
        tm_t, tn_t, tk_t = 512, 512, 1024
        budget = min(vmem_cap or (128 << 20), 100 << 20)
        multicore = False
    else:
        # v6e (and default): 918 TF/s, ~1.4 TB/s, 128 MiB VMEM.
        tm_t, tn_t, tk_t = 512, 1024, 2048
        budget = min(vmem_cap or (128 << 20), 100 << 20)
        multicore = False
    return tm_t, tn_t, tk_t, budget, multicore


def _linear_kernel(x_ref, w_ref, b_ref, o_ref, acc_ref):
    """One (tm, tn) output tile; K is the last ('arbitrary') grid axis.

    x_ref: (tm, tk) bf16    w_ref: (tn, tk) bf16 (PyTorch layout, no transpose)
    b_ref: (1, tn)  bf16    o_ref: (tm, tn) bf16    acc_ref: (tm, tn) f32
    """
    k = pl.program_id(2)

    # "nt" contraction: last dim of x with last dim of W -> (tm, tn), f32 acc.
    # Mosaic lowers this to a native transposed-RHS MXU matmul (no W relayout).
    prod = lax.dot_general(
        x_ref[...],
        w_ref[...],
        dimension_numbers=(((1,), (1,)), ((), ())),
        preferred_element_type=jnp.float32,
    )

    @pl.when(k == 0)
    def _():
        acc_ref[...] = prod          # first partial: store, no zero+read-add

    @pl.when(k > 0)
    def _():
        acc_ref[...] += prod

    @pl.when(k == pl.num_programs(2) - 1)
    def _():
        out = acc_ref[...] + b_ref[...].astype(jnp.float32)   # broadcast (1,tn)
        o_ref[...] = out.astype(o_ref.dtype)


@functools.partial(jax.jit, static_argnames=("tm", "tn", "tk"))
def deepgemm_linear(x, weight, bias=None, *, tm=None, tn=None, tk=None):
    """Equivalent of DeepGEMMLinear.forward: out = x @ weight.T + bias.

    x:      (M, K)  bfloat16
    weight: (N, K)  bfloat16   (PyTorch layout: out_features x in_features)
    bias:   (N,)    bfloat16 or None
    returns (M, N)  bfloat16
    """
    M, K = x.shape
    N, K2 = weight.shape
    assert K == K2, "in_features mismatch between x and weight"

    if bias is None:
        bias = jnp.zeros((N,), dtype=x.dtype)

    tm_t, tn_t, tk_t, vmem_budget, multicore = _generation_defaults()
    tm_t = tm if tm is not None else tm_t
    tn_t = tn if tn is not None else tn_t
    tk_t = tk if tk is not None else tk_t

    # Tiles: multiples of 16 (bf16 sublane packing) / 128 (lanes, MXU) that
    # divide the granule-aligned dims -> at most granule-1 elements of padding.
    tm = _pick_tile(M, tm_t, 16)
    tn = _pick_tile(N, tn_t, 128)
    tk = _pick_tile(K, tk_t, 128)

    # Stay within the per-generation VMEM budget (with ~8 MiB headroom).
    while _vmem_need_bytes(tm, tn, tk) + (8 << 20) > vmem_budget:
        if tk > 256:
            tk = _pick_tile(K, tk // 2, 128)
        elif tn > 256:
            tn = _pick_tile(N, tn // 2, 128)
        elif tm > 64:
            tm = _pick_tile(M, tm // 2, 16)
        else:
            break

    M_pad = _round_up(M, 16)
    N_pad = _round_up(N, 128)
    K_pad = _round_up(K, 128)

    # v7x has 2 TensorCores sharding the parallel grid axes: if both collapsed
    # to 1 (small-M inference), split N so the second core gets work.
    if multicore and (M_pad // tm) * (N_pad // tn) < 2 and N_pad >= 256:
        tn_split = _pick_tile(N, max(128, (N_pad // 2 // 128) * 128), 128)
        if N_pad // tn_split >= 2:
            tn = tn_split

    # Edge padding only when a dim is not aligned to its granule (cheap: at
    # most 15 rows / 127 cols; zeros in K contribute nothing to the matmul).
    x_p = x if (M_pad == M and K_pad == K) else jnp.pad(
        x, ((0, M_pad - M), (0, K_pad - K)))
    w_p = weight if (N_pad == N and K_pad == K) else jnp.pad(
        weight, ((0, N_pad - N), (0, K_pad - K)))
    b_p = (bias if N_pad == N else jnp.pad(bias, (0, N_pad - N))).reshape(1, N_pad)

    grid = (M_pad // tm, N_pad // tn, K_pad // tk)

    vmem_need = _vmem_need_bytes(tm, tn, tk)
    vmem_limit = int(min(vmem_need + (8 << 20), vmem_budget))

    io_bytes = 2  # bf16
    cost = pl.CostEstimate(
        flops=2 * M_pad * N_pad * K_pad,
        # x is re-read grid_n times, W is re-read grid_m times.
        bytes_accessed=io_bytes * (M_pad * K_pad * grid[1]
                                   + N_pad * K_pad * grid[0]
                                   + M_pad * N_pad),
        transcendentals=0,
    )

    out = pl.pallas_call(
        _linear_kernel,
        out_shape=jax.ShapeDtypeStruct((M_pad, N_pad), x.dtype),
        grid_spec=pltpu.PrefetchScalarGridSpec(
            num_scalar_prefetch=0,
            grid=grid,
            in_specs=[
                pl.BlockSpec((tm, tk), lambda i, j, k: (i, k)),   # x tile
                pl.BlockSpec((tn, tk), lambda i, j, k: (j, k)),   # W tile (N,K)
                pl.BlockSpec((1, tn), lambda i, j, k: (0, j)),    # bias tile
            ],
            out_specs=pl.BlockSpec((tm, tn), lambda i, j, k: (i, j)),
            scratch_shapes=[pltpu.VMEM((tm, tn), jnp.float32)],
        ),
        compiler_params=pltpu.CompilerParams(
            dimension_semantics=("parallel", "parallel", "arbitrary"),
            vmem_limit_bytes=vmem_limit,
        ),
        cost_estimate=cost,
    )(x_p, w_p, b_p)

    if M_pad != M or N_pad != N:
        out = out[:M, :N]
    return out
    # TODO(synk): `distributed=True` path (dist.all_reduce) not implemented;
    # would require a ring reduce via pltpu.make_async_remote_copy.


def init_params(key, in_features, out_features, dtype=jnp.bfloat16):
    """Deterministic reproduction of reset_parameters():
    kaiming_uniform_(a=sqrt(5)) -> U(-1/sqrt(fan_in), 1/sqrt(fan_in)) for weight,
    same bound for bias."""
    kw, kb = jax.random.split(key)
    bound = 1.0 / math.sqrt(in_features)
    weight = jax.random.uniform(
        kw, (out_features, in_features), minval=-bound, maxval=bound,
        dtype=jnp.float32
    ).astype(dtype)
    bias = jax.random.uniform(
        kb, (out_features,), minval=-bound, maxval=bound, dtype=jnp.float32
    ).astype(dtype)
    return weight, bias


if __name__ == "__main__":
    key = jax.random.PRNGKey(0)
    kx, kp = jax.random.split(key)

    batch = 8
    in_features = 256
    out_features = 128

    weight, bias = init_params(kp, in_features, out_features)
    x = jax.random.normal(kx, (batch, in_features), dtype=jnp.float32).astype(
        jnp.bfloat16
    )

    out = deepgemm_linear(x, weight, bias)
    out = jax.block_until_ready(out)

    # Reference: f32 matmul of the same bf16 inputs (HIGHEST precision so the
    # reference itself is not bf16-truncated), f32 bias add.
    ref = (
        jnp.dot(
            x.astype(jnp.float32),
            weight.astype(jnp.float32).T,
            precision=jax.lax.Precision.HIGHEST,
        )
        + bias.astype(jnp.float32)
    )
    assert out.shape == (batch, out_features)
    assert out.dtype == jnp.bfloat16
    assert jnp.allclose(
        out.astype(jnp.float32), ref, atol=2e-2, rtol=2e-2
    ), "kernel output mismatch vs f32 reference"

    print("KERNEL_OK")
</pallas_src>

<mosaic_0001>
module attributes {stable_mosaic.version = 11 : i64} {
  func.func @_linear_kernel(%arg0: i32, %arg1: i32, %arg2: i32, %arg3: memref<16x256xbf16, #tpu.memory_space<vmem>>, %arg4: memref<128x256xbf16, #tpu.memory_space<vmem>>, %arg5: memref<1x128xbf16, #tpu.memory_space<vmem>>, %arg6: memref<16x128xbf16, #tpu.memory_space<vmem>>, %arg7: memref<16x128xf32, #tpu.memory_space<vmem>>) attributes {dimension_semantics = [#tpu.dimension_semantics<parallel>, #tpu.dimension_semantics<parallel>, #tpu.dimension_semantics<arbitrary>], iteration_bounds = array<i64: 1, 1, 1>, scalar_prefetch = 0 : i64, scratch_operands = 1 : i64, tpu.core_type = #tpu.core_type<tc>, window_params = [{transform_indices = @transform_0, window_bounds = array<i64: 16, 256>}, {transform_indices = @transform_1, window_bounds = array<i64: 128, 256>}, {transform_indices = @transform_2, window_bounds = array<i64: 1, 128>}, {transform_indices = @transform_3, window_bounds = array<i64: 16, 128>}]} {
    %c0 = arith.constant 0 : index
    %c0_0 = arith.constant 0 : index
    %0 = vector.load %arg3[%c0, %c0_0] : memref<16x256xbf16, #tpu.memory_space<vmem>>, vector<16x256xbf16>
    %c0_1 = arith.constant 0 : index
    %c0_2 = arith.constant 0 : index
    %1 = vector.load %arg4[%c0_1, %c0_2] : memref<128x256xbf16, #tpu.memory_space<vmem>>, vector<128x256xbf16>
    %cst = arith.constant dense<0.000000e+00> : vector<16x128xf32>
    %2 = tpu.matmul %0, %1, %cst {dimension_numbers = #tpu.dot_dimension_numbers<[1], [1], [0], [0], [0, 0, 1, 0], [], []>} : vector<16x256xbf16>, vector<128x256xbf16>, vector<16x128xf32> -> vector<16x128xf32>
    %c0_i32 = arith.constant 0 : i32
    %3 = arith.cmpi eq, %arg2, %c0_i32 : i32
    %4 = arith.extui %3 : i1 to i32
    %c0_i32_3 = arith.constant 0 : i32
    %5 = arith.cmpi ne, %4, %c0_i32_3 : i32
    scf.if %5 {
      %c0_8 = arith.constant 0 : index
      %c0_9 = arith.constant 0 : index
      %12 = vector.load %arg7[%c0_8, %c0_9] : memref<16x128xf32, #tpu.memory_space<vmem>>, vector<16x128xf32>
      tpu.vector_store %arg7[%c0_8, %c0_9], %2 {strides = array<i32>} : memref<16x128xf32, #tpu.memory_space<vmem>>, vector<16x128xf32>,
    } else {
    }
    %c0_i32_4 = arith.constant 0 : i32
    %6 = arith.cmpi sgt, %arg2, %c0_i32_4 : i32
    %7 = arith.extui %6 : i1 to i32
    %c0_i32_5 = arith.constant 0 : i32
    %8 = arith.cmpi ne, %7, %c0_i32_5 : i32
    scf.if %8 {
      %c0_8 = arith.constant 0 : index
      %c0_9 = arith.constant 0 : index
      %12 = vector.load %arg7[%c0_8, %c0_9] : memref<16x128xf32, #tpu.memory_space<vmem>>, vector<16x128xf32>
      %13 = arith.addf %12, %2 : vector<16x128xf32>
      %c0_10 = arith.constant 0 : index
      %c0_11 = arith.constant 0 : index
      %14 = vector.load %arg7[%c0_10, %c0_11] : memref<16x128xf32, #tpu.memory_space<vmem>>, vector<16x128xf32>
      tpu.vector_store %arg7[%c0_10, %c0_11], %13 {strides = array<i32>} : memref<16x128xf32, #tpu.memory_space<vmem>>, vector<16x128xf32>,
    } else {
    }
    %c0_i32_6 = arith.constant 0 : i32
    %9 = arith.cmpi eq, %arg2, %c0_i32_6 : i32
    %10 = arith.extui %9 : i1 to i32
    %c0_i32_7 = arith.constant 0 : i32
    %11 = arith.cmpi ne, %10, %c0_i32_7 : i32
    scf.if %11 {
      %c0_8 = arith.constant 0 : index
      %c0_9 = arith.constant 0 : index
      %12 = vector.load %arg7[%c0_8, %c0_9] : memref<16x128xf32, #tpu.memory_space<vmem>>, vector<16x128xf32>
      %c0_10 = arith.constant 0 : index
      %c0_11 = arith.constant 0 : index
      %13 = vector.load %arg5[%c0_10, %c0_11] : memref<1x128xbf16, #tpu.memory_space<vmem>>, vector<1x128xbf16>
      %14 = arith.extf %13 : vector<1x128xbf16> to vector<1x128xf32>
      %15 = vector.broadcast %14 : vector<1x128xf32> to vector<16x128xf32>
      %16 = arith.addf %12, %15 : vector<16x128xf32>
      %17 = arith.truncf %16 : vector<16x128xf32> to vector<16x128xbf16>
      %c0_12 = arith.constant 0 : index
      %c0_13 = arith.constant 0 : index
      %18 = vector.load %arg6[%c0_12, %c0_13] : memref<16x128xbf16, #tpu.memory_space<vmem>>, vector<16x128xbf16>
      tpu.vector_store %arg6[%c0_12, %c0_13], %17 {strides = array<i32>} : memref<16x128xbf16, #tpu.memory_space<vmem>>, vector<16x128xbf16>,
    } else {
    }
    return
  }
  func.func @transform_0(%arg0: i32, %arg1: i32, %arg2: i32) -> (i32, i32) {
    %c0_i32 = arith.constant 0 : i32
    return %arg0, %arg2 : i32, i32
  }
  func.func @transform_1(%arg0: i32, %arg1: i32, %arg2: i32) -> (i32, i32) {
    %c0_i32 = arith.constant 0 : i32
    return %arg1, %arg2 : i32, i32
  }
  func.func @transform_2(%arg0: i32, %arg1: i32, %arg2: i32) -> (i32, i32) {
    %c0_i32 = arith.constant 0 : i32
    %c0_i32_0 = arith.constant 0 : i32
    return %c0_i32, %arg1 : i32, i32
  }
  func.func @transform_3(%arg0: i32, %arg1: i32, %arg2: i32) -> (i32, i32) {
    %c0_i32 = arith.constant 0 : i32
    return %arg0, %arg1 : i32, i32
  }
}

</mosaic_0001>

<llo_original>
// kernel: deepgemm_linear.1
$region0: #{deepgemm_linear.1}
  #allocation0 [shape = 'u32[]', space=smem, size = 0x4, offset = 0x4, fixed_abs, tag = 'smem constant byte address 0x4 - core index']
  #allocation1 [shape = 'u32[144,128]{1,0:T(1,128)}', space=vmem, size = 0x12000, scoped, tag = 'internal scratch']
  #allocation2 [shape = 'f32[16,128]{1,0:T(8,128)}', space=vmem, size = 0x2000, scoped, tag = 'scratch operand']
  %s0 = inlined_call_operand.vmem [shape: bf16[16,256], index: 0, kind: input, shape index: {}]
  %s1 = inlined_call_operand.hbm [shape: bf16[128,256], index: 1, kind: input, shape index: {}]
  %s2 = inlined_call_operand.vmem [shape: bf16[1,128], index: 2, kind: input, shape index: {}]
  %s3 = inlined_call_operand.vmem [shape: bf16[16,128], index: 3, kind: output, shape index: {}]
  %s4 = sld [smem:[#allocation0]]
  $region38: #{deepgemm_linear.1} parent=0
    _
  %s6 = ssub.s32 1, %s4
  %s7 = scalar_select 0, %s6, %s4
  $region1: #{deepgemm_linear.1} parent=0
    #allocation3 [shape = 'u8[65536]{0}', space=vmem, size = 0x10000, scoped, tag = 'input window, operand 1, single buffered']
    #allocation4 [shape = 's32[1]{0}', space=sflag, size = 0x4, scoped, tag = 'scoped memory for deepgemm_linear.1']
    %8 = vsyncpa [#allocation4], 0
    // Predicated region
    $region2: #{deepgemm_linear.1} parent=1 // pred_check
      _
    $region3: #{deepgemm_linear.1} parent=1 // pred_check_branch
      %10 = sbr.rel (0) target = $region5
    $region4: #{deepgemm_linear.1} parent=1 // pred_region
      _
    $region5: #{deepgemm_linear.1} parent=1 // pred_fallthru
      _
    // Predicated region
    $region6: #{deepgemm_linear.1} parent=1 // pred_check
      _
    $region7: #{deepgemm_linear.1} parent=1 // pred_check_branch
      %12 = sbr.rel (0) target = $region9
    $region8: #{deepgemm_linear.1} parent=1 // pred_region
      %s14 = ssub.s32 2048, 2048
      %15 = vsyncadd [#allocation4], %s14
      %s16 = sshll.u32 [#allocation3], 4
      %s17 = int_to_ptr.vmem [resolvable:$true] %s16
      %22 = dma.hbm_to_vmem [thread:$0]  %s1, 2048, %s17, [#allocation4], 128, 128, 8
    $region9: #{deepgemm_linear.1} parent=1 // pred_fallthru
      _
    // Predicated region
    $region10: #{deepgemm_linear.1} parent=1 // pred_check
      _
    $region11: #{deepgemm_linear.1} parent=1 // pred_check_branch
      %24 = sbr.rel (0) target = $region13
    $region12: #{deepgemm_linear.1} parent=1 // pred_region
      _
    $region13: #{deepgemm_linear.1} parent=1 // pred_fallthru
      _
    // Predicated region
    $region14: #{deepgemm_linear.1} parent=1 // pred_check
      _
    $region15: #{deepgemm_linear.1} parent=1 // pred_check_branch
      %26 = sbr.rel (0) target = $region17
    $region16: #{deepgemm_linear.1} parent=1 // pred_region
      %27 = dma.done [#allocation4], 2048
    $region17: #{deepgemm_linear.1} parent=1 // pred_fallthru
      _
    %v29 = vld [vmem:[%s0] sm:$0xff]
    %v30 = vld [vmem:[%s0 + $0x8] sm:$0xff]
    %v31 = vld [vmem:[#allocation3] sm:$0xff]
    %v32 = vld [vmem:[#allocation3 + $0x8] sm:$0xff]
    %v33 = vld [vmem:[#allocation3 + $0x10] sm:$0xff]
    %v34 = vld [vmem:[#allocation3 + $0x18] sm:$0xff]
    %v35 = vld [vmem:[#allocation3 + $0x20] sm:$0xff]
    %v36 = vld [vmem:[#allocation3 + $0x28] sm:$0xff]
    %v37 = vld [vmem:[#allocation3 + $0x30] sm:$0xff]
    %v38 = vld [vmem:[#allocation3 + $0x38] sm:$0xff]
    %v39 = vld [vmem:[#allocation3 + $0x40] sm:$0xff]
    %v40 = vld [vmem:[#allocation3 + $0x48] sm:$0xff]
    %v41 = vld [vmem:[#allocation3 + $0x50] sm:$0xff]
    %v42 = vld [vmem:[#allocation3 + $0x58] sm:$0xff]
    %v43 = vld [vmem:[#allocation3 + $0x60] sm:$0xff]
    %v44 = vld [vmem:[#allocation3 + $0x68] sm:$0xff]
    %v45 = vld [vmem:[#allocation3 + $0x70] sm:$0xff]
    %v46 = vld [vmem:[#allocation3 + $0x78] sm:$0xff]
    %v49 = vunpack.c.l.b16 %v29
    %v50 = vunpack.c.h.b16 %v29
    %v51 = vunpack.c.l.b16 %v30
    %v52 = vunpack.c.h.b16 %v30
    %v53 = vpack.c.b16 %v51, %v49
    %v54 = vpack.c.b16 %v52, %v50
    %v73 = vunpack.c.l.b16 %v31
    %v74 = vunpack.c.h.b16 %v31
    %v75 = vunpack.c.l.b16 %v32
    %v76 = vunpack.c.h.b16 %v32
    %v77 = vunpack.c.l.b16 %v33
    %v78 = vunpack.c.h.b16 %v33
    %v79 = vunpack.c.l.b16 %v34
    %v80 = vunpack.c.h.b16 %v34
    %v81 = vunpack.c.l.b16 %v35
    %v82 = vunpack.c.h.b16 %v35
    %v83 = vunpack.c.l.b16 %v36
    %v84 = vunpack.c.h.b16 %v36
    %v85 = vunpack.c.l.b16 %v37
    %v86 = vunpack.c.h.b16 %v37
    %v87 = vunpack.c.l.b16 %v38
    %v88 = vunpack.c.h.b16 %v38
    %v89 = vunpack.c.l.b16 %v39
    %v90 = vunpack.c.h.b16 %v39
    %v91 = vunpack.c.l.b16 %v40
    %v92 = vunpack.c.h.b16 %v40
    %v93 = vunpack.c.l.b16 %v41
    %v94 = vunpack.c.h.b16 %v41
    %v95 = vunpack.c.l.b16 %v42
    %v96 = vunpack.c.h.b16 %v42
    %v97 = vunpack.c.l.b16 %v43
    %v98 = vunpack.c.h.b16 %v43
    %v99 = vunpack.c.l.b16 %v44
    %v100 = vunpack.c.h.b16 %v44
    %v101 = vunpack.c.l.b16 %v45
    %v102 = vunpack.c.h.b16 %v45
    %v103 = vunpack.c.l.b16 %v46
    %v104 = vunpack.c.h.b16 %v46
    %v105 = vpack.c.b16 %v75, %v73
    %v106 = vpack.c.b16 %v76, %v74
    %v107 = vpack.c.b16 %v79, %v77
    %v108 = vpack.c.b16 %v80, %v78
    %v109 = vpack.c.b16 %v83, %v81
    %v110 = vpack.c.b16 %v84, %v82
    %v111 = vpack.c.b16 %v87, %v85
    %v112 = vpack.c.b16 %v88, %v86
    %v113 = vpack.c.b16 %v91, %v89
    %v114 = vpack.c.b16 %v92, %v90
    %v115 = vpack.c.b16 %v95, %v93
    %v116 = vpack.c.b16 %v96, %v94
    %v117 = vpack.c.b16 %v99, %v97
    %v118 = vpack.c.b16 %v100, %v98
    %v119 = vpack.c.b16 %v103, %v101
    %v120 = vpack.c.b16 %v104, %v102
    %137 = vmatprep.subr.bf16.mxu0 %v106
    %138 = vmatpush1.bf16.xpose.msra.mxu0 %v105
    %139 = vmatprep.subr.bf16.mxu0 %v108
    %140 = vmatpush1.bf16.xpose.msra.mxu0 %v107
    %141 = vmatprep.subr.bf16.mxu0 %v110
    %142 = vmatpush1.bf16.xpose.msra.mxu0 %v109
    %143 = vmatprep.subr.bf16.mxu0 %v112
    %144 = vmatpush1.bf16.xpose.msra.mxu0 %v111
    %145 = vmatprep.subr.bf16.mxu0 %v114
    %146 = vmatpush1.bf16.xpose.msra.mxu0 %v113
    %147 = vmatprep.subr.bf16.mxu0 %v116
    %148 = vmatpush1.bf16.xpose.msra.mxu0 %v115
    %149 = vmatprep.subr.bf16.mxu0 %v118
    %150 = vmatpush1.bf16.xpose.msra.mxu0 %v117
    %151 = vmatprep.subr.bf16.mxu0 %v120
    %152 = vmatpush1.bf16.xpose.msra.mxu0 %v119
    %153 = vmatprep.subr.bf16.mxu0 0
    %154 = vmatpush1.bf16.xpose.msra.mxu0 0
    %155 = vmatprep.subr.bf16.mxu0 0
    %156 = vmatpush1.bf16.xpose.msra.mxu0 0
    %157 = vmatprep.subr.bf16.mxu0 0
    %158 = vmatpush1.bf16.xpose.msra.mxu0 0
    %159 = vmatprep.subr.bf16.mxu0 0
    %160 = vmatpush1.bf16.xpose.msra.mxu0 0
    %161 = vmatprep.subr.bf16.mxu0 0
    %162 = vmatpush1.bf16.xpose.msra.mxu0 0
    %163 = vmatprep.subr.bf16.mxu0 0
    %164 = vmatpush1.bf16.xpose.msra.mxu0 0
    %165 = vmatprep.subr.bf16.mxu0 0
    %166 = vmatpush1.bf16.xpose.msra.mxu0 0
    %167 = vmatprep.subr.bf16.mxu0 0
    %168 = vmatpush1.bf16.xpose.msra.mxu0 0
    %169 = vmatprep.mubr.bf16.mxu0 %v54
    %170 = vmatmul.mubr.bf16.gmra.mrb[0].mxu0 %v53
    %v171 = vpop.f32.mrb[0].mxu0
    %v172 = vadd.f32 0.0, %v171
    %v173 = vpop.f32.mrb[0].mxu0
    %v174 = vpop.f32.mrb[0].mxu0
    %v175 = vadd.f32 0.0, %v174
    %v176 = vpop.f32.mrb[0].mxu0
    %177 = vdwg.mxu0
    %p178 = scmp.eq.s32.totalorder 0, 0
    // Predicated region
    $region18: #{deepgemm_linear.1} parent=1 // pred_check
      %p179 = pneg %p178
    $region19: #{deepgemm_linear.1} parent=1 // pred_check_branch
      %181 = sbr.rel (%p179) target = $region21
    $region20: #{deepgemm_linear.1} parent=1 // pred_region
      %182 = vst [vmem:[#allocation2] sm:$0xff] %v172
      %183 = vst [vmem:[#allocation2 + $0x8] sm:$0xff] %v175
    $region21: #{deepgemm_linear.1} parent=1 // pred_fallthru
      _
    %p184 = scmp.gt.s32.totalorder 0, 0
    // Predicated region
    $region22: #{deepgemm_linear.1} parent=1 // pred_check
      %p185 = pneg %p184
    $region23: #{deepgemm_linear.1} parent=1 // pred_check_branch
      %187 = sbr.rel (%p185) target = $region25
    $region24: #{deepgemm_linear.1} parent=1 // pred_region
      %v188 = vld [vmem:[#allocation2] sm:$0xff]
      %v189 = vld [vmem:[#allocation2 + $0x8] sm:$0xff]
      %v190 = vadd.f32 %v188, %v172
      %v191 = vadd.f32 %v189, %v175
      %192 = vst [vmem:[#allocation2] sm:$0xff] %v190
      %193 = vst [vmem:[#allocation2 + $0x8] sm:$0xff] %v191
    $region25: #{deepgemm_linear.1} parent=1 // pred_fallthru
      _
    // Predicated region
    $region26: #{deepgemm_linear.1} parent=1 // pred_check
      %p194 = pneg %p178
    $region27: #{deepgemm_linear.1} parent=1 // pred_check_branch
      %196 = sbr.rel (%p194) target = $region29
    $region28: #{deepgemm_linear.1} parent=1 // pred_region
      %v197 = vld [vmem:[#allocation2] sm:$0xff]
      %v198 = vld [vmem:[#allocation2 + $0x8] sm:$0xff]
      %v199 = vld [vmem:[%s2] sm:$0x1]
      %v200 = vunpack.c.l.bf16 %v199
      %v201 = vlaneseq
      %v202 = vshrl.u32 %v201, 7
      %v203 = vsub.s32 0, %v202
      %v204 = vrot.slane %v200, %v203
      %v205 = vadd.f32 %v197, %v204
      %v206 = vadd.f32 %v198, %v204
      %v207 = vpack.c.bf16 %v206, %v205
      %v209 = vunpack.c.l.b16 %v207
      %v210 = vunpack.c.h.b16 %v207
      %v211 = vpack.c.b16 %v209, %v209
      %v212 = vpack.c.b16 %v210, %v210
      %215 = vst [vmem:[%s3] sm:$0xf] %v211
      %216 = vst [vmem:[%s3 + $0x4] sm:$0xf] %v212
    $region29: #{deepgemm_linear.1} parent=1 // pred_fallthru
      _
    // Predicated region
    $region30: #{deepgemm_linear.1} parent=1 // pred_check
      _
    $region31: #{deepgemm_linear.1} parent=1 // pred_check_branch
      %218 = sbr.rel (0) target = $region33
    $region32: #{deepgemm_linear.1} parent=1 // pred_region
      _
    $region33: #{deepgemm_linear.1} parent=1 // pred_fallthru
      _
    // Predicated region
    $region34: #{deepgemm_linear.1} parent=1 // pred_check
      _
    $region35: #{deepgemm_linear.1} parent=1 // pred_check_branch
      %220 = sbr.rel (0) target = $region37
    $region36: #{deepgemm_linear.1} parent=1 // pred_region
      _
    $region37: #{deepgemm_linear.1} parent=1 // pred_fallthru
      _
    %221 = vsyncpa [#allocation4], 1

</llo_original>
